<compile_context>
chip_gen: v6e
topology: v6e:2x2x1
jax: 0.10.0
libtpu: 0.0.40
codegen_flags: <defaults>
</compile_context>

<pallas_src>
import jax
import jax.numpy as jnp
from jax.experimental import pallas as pl
from jax.experimental.pallas import tpu as pltpu


LANE = 128                      # TPU lane width (batch tile granularity)
SUBLANE = 8                     # TPU sublane width (f32)
TILE_B_MAX = 32768              # lanes per grid step; VMEM/step ~12 MiB incl.
                                # double-buffered x/out tiles + hT intermediates
VMEM_LIMIT_BYTES = 32 * 1024 * 1024   # explicit scoped-VMEM budget (all gens)
COMPUTE_DTYPE = jnp.bfloat16    # MXU bf16 datapath; f32 accumulation in-kernel


def _round_up(n, m):
    return (n + m - 1) // m * m


def _cdiv(a, b):
    return (a + b - 1) // b


def _choose_tiling(B, tile_b_max):
    """Balanced batch tiles, lane-aligned, >=2 grid steps when work allows."""
    bp_rough = _round_up(B, LANE)
    n_tiles = max(1, _cdiv(bp_rough, tile_b_max))
    if n_tiles == 1 and bp_rough >= 2 * LANE:
        n_tiles = 2                      # keep both v7x TCs busy + pipeline
    tile_b = _round_up(_cdiv(bp_rough, n_tiles), LANE)
    return tile_b, tile_b * n_tiles, n_tiles


def cnn_kernel(x_ref, wc_ref, bc_ref, w12_ref, b12_ref, o_ref):
    # Conv1d (valid, L_out = 1) as a matmul with batch on the lane axis:
    #   hT = wcT @ xT : (Hp, CK) @ (CK, tile_b) -> (Hp, tile_b), f32 acc.
    h = jnp.dot(wc_ref[...], x_ref[...], preferred_element_type=jnp.float32)
    # Fused bias + ReLU + bf16 downcast (single pass, one live hidden copy).
    h = jnp.maximum(h + bc_ref[...], 0.0).astype(w12_ref.dtype)
    # Folded Linear(hidden,10) -> Linear(10,out):
    #   outT = w12T @ hT : (Op, Hp) @ (Hp, tile_b) -> (Op, tile_b).
    out = jnp.dot(w12_ref[...], h, preferred_element_type=jnp.float32)
    o_ref[...] = (out + b12_ref[...]).astype(o_ref.dtype)


def cnn_forward(x, conv_w, conv_b, w1, b1, w2, b2,
                *, tile_b_max=TILE_B_MAX, compute_dtype=COMPUTE_DTYPE):
    """x: (B, C, L) with L == kernel_size == 7 (so flatten -> hidden_dim)."""
    B, C, L = x.shape
    H, C_w, K = conv_w.shape
    assert C == C_w and L == K, "sequence length must equal kernel_size (=7)"
    out_size = w2.shape[0]
    CK = C * K

    # ---- wrapper-side prep (tiny, fused under jit) ----
    Hp = _round_up(H, 16)            # hidden on sublanes; 16 = bf16 packing
    Op = _round_up(out_size, SUBLANE)  # output on sublanes; 8 = f32 tile

    # Conv as matmul, transposed: (Hp, CK). Zero rows pass exactly through
    # ReLU and the folded linear, so the padding is exact.
    wc_t = jnp.zeros((Hp, CK), compute_dtype).at[:H, :].set(
        conv_w.reshape(H, CK).astype(compute_dtype))
    bc_t = jnp.zeros((Hp, 1), jnp.float32).at[:H, 0].set(
        conv_b.astype(jnp.float32))
    # Fold the two affine layers (exact): w12T = w2 @ w1, b12T = w2 @ b1 + b2.
    w12_t = jnp.zeros((Op, Hp), compute_dtype).at[:out_size, :H].set(
        (w2 @ w1).astype(compute_dtype))
    b12_t = jnp.zeros((Op, 1), jnp.float32).at[:out_size, 0].set(
        (w2 @ b1 + b2).astype(jnp.float32))

    # Batch on lanes: x -> (CK, Bp) bf16, balanced lane-aligned tiles.
    tile_b, Bp, n_tiles = _choose_tiling(B, tile_b_max)
    xt = x.reshape(B, CK).T.astype(compute_dtype)            # (CK, B)
    if Bp != B:
        xt = jnp.pad(xt, ((0, 0), (0, Bp - B)))

    cost = pl.CostEstimate(
        flops=2 * Bp * (CK * Hp + Hp * Op),
        transcendentals=0,
        bytes_accessed=(xt.size * xt.dtype.itemsize
                        + (wc_t.size + w12_t.size) * 2
                        + (bc_t.size + b12_t.size) * 4
                        + Op * Bp * 4),
    )

    out_t = pl.pallas_call(
        cnn_kernel,
        out_shape=jax.ShapeDtypeStruct((Op, Bp), jnp.float32),
        grid_spec=pltpu.PrefetchScalarGridSpec(
            num_scalar_prefetch=0,
            grid=(n_tiles,),
            in_specs=[
                pl.BlockSpec((CK, tile_b), lambda i: (0, i)),   # x: streamed
                pl.BlockSpec((Hp, CK), lambda i: (0, 0)),       # conv weight (resident)
                pl.BlockSpec((Hp, 1), lambda i: (0, 0)),        # conv bias
                pl.BlockSpec((Op, Hp), lambda i: (0, 0)),       # folded linear weight
                pl.BlockSpec((Op, 1), lambda i: (0, 0)),        # folded linear bias
            ],
            out_specs=pl.BlockSpec((Op, tile_b), lambda i: (0, i)),
        ),
        compiler_params=pltpu.CompilerParams(
            dimension_semantics=("parallel",),
            vmem_limit_bytes=VMEM_LIMIT_BYTES),
        cost_estimate=cost,
    )(xt, wc_t, bc_t, w12_t, b12_t)

    return out_t[:out_size, :B].T                             # (B, out_size)


def init_params(key, input_size, hidden_dim, output_size, kernel_size=7):
    """Deterministic PyTorch-style uniform(-1/sqrt(fan_in), 1/sqrt(fan_in)) init."""
    ks = jax.random.split(key, 6)

    def u(k, shape, fan_in):
        bound = 1.0 / jnp.sqrt(fan_in)
        return jax.random.uniform(k, shape, jnp.float32, -bound, bound)

    conv_w = u(ks[0], (hidden_dim, input_size, kernel_size), input_size * kernel_size)
    conv_b = u(ks[1], (hidden_dim,), input_size * kernel_size)
    w1 = u(ks[2], (10, hidden_dim), hidden_dim)
    b1 = u(ks[3], (10,), hidden_dim)
    w2 = u(ks[4], (output_size, 10), 10)
    b2 = u(ks[5], (output_size,), 10)
    return conv_w, conv_b, w1, b1, w2, b2


if __name__ == "__main__":
    key = jax.random.PRNGKey(0)
    batch, input_size, hidden_dim, output_size, kernel_size = 2, 4, 32, 5, 7

    kx, kp = jax.random.split(key)
    x = jax.random.normal(kx, (batch, input_size, kernel_size), jnp.float32)
    params = init_params(kp, input_size, hidden_dim, output_size, kernel_size)

    out = jax.jit(cnn_forward)(x, *params)
    out = jax.block_until_ready(out)
    assert out.shape == (batch, output_size)

    conv_w, conv_b, w1, b1, w2, b2 = params

    # Reference 1: exact PyTorch-module semantics in f32 (bf16-tolerance check).
    h_ref = jnp.einsum("bck,hck->bh", x, conv_w) + conv_b
    h_ref = jnp.maximum(h_ref, 0.0)
    ref_f32 = (h_ref @ w1.T + b1) @ w2.T + b2
    assert jnp.allclose(out, ref_f32, atol=5e-2, rtol=5e-2)

    # Reference 2: same math with the kernel's bf16 operand casts and
    # transposed (batch-on-lanes) matmul order (tight check).
    xb = x.reshape(batch, -1).T.astype(jnp.bfloat16)              # (CK, B)
    wcb = conv_w.reshape(hidden_dim, -1).astype(jnp.bfloat16)     # (H, CK)
    hb = jnp.maximum(
        jnp.dot(wcb, xb, preferred_element_type=jnp.float32) + conv_b[:, None],
        0.0)
    w12b = (w2 @ w1).astype(jnp.bfloat16)                         # (out, H)
    b12b = (w2 @ b1 + b2)[:, None]
    ref_bf16 = (jnp.dot(w12b, hb.astype(jnp.bfloat16),
                        preferred_element_type=jnp.float32) + b12b).T
    assert jnp.allclose(out, ref_bf16, atol=1e-3, rtol=1e-3)

    print("KERNEL_OK")
</pallas_src>

<mosaic_0001>
module attributes {stable_mosaic.version = 11 : i64} {
  func.func @cnn_kernel(%arg0: i32, %arg1: memref<28x128xbf16, #tpu.memory_space<vmem>>, %arg2: memref<32x28xbf16, #tpu.memory_space<vmem>>, %arg3: memref<32x1xf32, #tpu.memory_space<vmem>>, %arg4: memref<8x32xbf16, #tpu.memory_space<vmem>>, %arg5: memref<8x1xf32, #tpu.memory_space<vmem>>, %arg6: memref<8x128xf32, #tpu.memory_space<vmem>>) attributes {dimension_semantics = [#tpu.dimension_semantics<parallel>], iteration_bounds = array<i64: 1>, scalar_prefetch = 0 : i64, scratch_operands = 0 : i64, tpu.core_type = #tpu.core_type<tc>, window_params = [{transform_indices = @transform_0, window_bounds = array<i64: 28, 128>}, {pipeline_mode = #tpu.pipeline_mode<synchronous>, transform_indices = @transform_1, window_bounds = array<i64: 32, 28>}, {pipeline_mode = #tpu.pipeline_mode<synchronous>, transform_indices = @transform_2, window_bounds = array<i64: 32, 1>}, {pipeline_mode = #tpu.pipeline_mode<synchronous>, transform_indices = @transform_3, window_bounds = array<i64: 8, 32>}, {pipeline_mode = #tpu.pipeline_mode<synchronous>, transform_indices = @transform_4, window_bounds = array<i64: 8, 1>}, {transform_indices = @transform_5, window_bounds = array<i64: 8, 128>}]} {
    %c0 = arith.constant 0 : index
    %c0_0 = arith.constant 0 : index
    %0 = vector.load %arg2[%c0, %c0_0] : memref<32x28xbf16, #tpu.memory_space<vmem>>, vector<32x28xbf16>
    %c0_1 = arith.constant 0 : index
    %c0_2 = arith.constant 0 : index
    %1 = vector.load %arg1[%c0_1, %c0_2] : memref<28x128xbf16, #tpu.memory_space<vmem>>, vector<28x128xbf16>
    %cst = arith.constant dense<0.000000e+00> : vector<32x128xf32>
    %2 = tpu.matmul %0, %1, %cst {dimension_numbers = #tpu.dot_dimension_numbers<[1], [0], [0], [1], [0, 0, 1, 1], [], []>} : vector<32x28xbf16>, vector<28x128xbf16>, vector<32x128xf32> -> vector<32x128xf32>
    %c0_3 = arith.constant 0 : index
    %c0_4 = arith.constant 0 : index
    %3 = vector.load %arg3[%c0_3, %c0_4] : memref<32x1xf32, #tpu.memory_space<vmem>>, vector<32x1xf32>
    %4 = vector.broadcast %3 : vector<32x1xf32> to vector<32x128xf32>
    %5 = arith.addf %2, %4 : vector<32x128xf32>
    %cst_5 = arith.constant 0.000000e+00 : f32
    %6 = vector.broadcast %cst_5 : f32 to vector<32x128xf32>
    %7 = arith.maximumf %5, %6 : vector<32x128xf32>
    %8 = arith.truncf %7 : vector<32x128xf32> to vector<32x128xbf16>
    %c0_6 = arith.constant 0 : index
    %c0_7 = arith.constant 0 : index
    %9 = vector.load %arg4[%c0_6, %c0_7] : memref<8x32xbf16, #tpu.memory_space<vmem>>, vector<8x32xbf16>
    %cst_8 = arith.constant dense<0.000000e+00> : vector<8x128xf32>
    %10 = tpu.matmul %9, %8, %cst_8 {dimension_numbers = #tpu.dot_dimension_numbers<[1], [0], [0], [1], [0, 0, 1, 1], [], []>} : vector<8x32xbf16>, vector<32x128xbf16>, vector<8x128xf32> -> vector<8x128xf32>
    %c0_9 = arith.constant 0 : index
    %c0_10 = arith.constant 0 : index
    %11 = vector.load %arg5[%c0_9, %c0_10] : memref<8x1xf32, #tpu.memory_space<vmem>>, vector<8x1xf32>
    %12 = vector.broadcast %11 : vector<8x1xf32> to vector<8x128xf32>
    %13 = arith.addf %10, %12 : vector<8x128xf32>
    %c0_11 = arith.constant 0 : index
    %c0_12 = arith.constant 0 : index
    %14 = vector.load %arg6[%c0_11, %c0_12] : memref<8x128xf32, #tpu.memory_space<vmem>>, vector<8x128xf32>
    tpu.vector_store %arg6[%c0_11, %c0_12], %13 {strides = array<i32>} : memref<8x128xf32, #tpu.memory_space<vmem>>, vector<8x128xf32>,
    return
  }
  func.func @transform_0(%arg0: i32) -> (i32, i32) {
    %c0_i32 = arith.constant 0 : i32
    %c0_i32_0 = arith.constant 0 : i32
    return %c0_i32, %arg0 : i32, i32
  }
  func.func @transform_1(%arg0: i32) -> (i32, i32) {
    %c0_i32 = arith.constant 0 : i32
    %c0_i32_0 = arith.constant 0 : i32
    %c0_i32_1 = arith.constant 0 : i32
    return %c0_i32, %c0_i32_0 : i32, i32
  }
  func.func @transform_2(%arg0: i32) -> (i32, i32) {
    %c0_i32 = arith.constant 0 : i32
    %c0_i32_0 = arith.constant 0 : i32
    %c0_i32_1 = arith.constant 0 : i32
    return %c0_i32, %c0_i32_0 : i32, i32
  }
  func.func @transform_3(%arg0: i32) -> (i32, i32) {
    %c0_i32 = arith.constant 0 : i32
    %c0_i32_0 = arith.constant 0 : i32
    %c0_i32_1 = arith.constant 0 : i32
    return %c0_i32, %c0_i32_0 : i32, i32
  }
  func.func @transform_4(%arg0: i32) -> (i32, i32) {
    %c0_i32 = arith.constant 0 : i32
    %c0_i32_0 = arith.constant 0 : i32
    %c0_i32_1 = arith.constant 0 : i32
    return %c0_i32, %c0_i32_0 : i32, i32
  }
  func.func @transform_5(%arg0: i32) -> (i32, i32) {
    %c0_i32 = arith.constant 0 : i32
    %c0_i32_0 = arith.constant 0 : i32
    return %c0_i32, %arg0 : i32, i32
  }
}

</mosaic_0001>

<llo_original>
// kernel: cnn_forward.1
$region0: #{cnn_forward.1}
  #allocation0 [shape = 'u32[]', space=smem, size = 0x4, offset = 0x4, fixed_abs, tag = 'smem constant byte address 0x4 - core index']
  #allocation1 [shape = 'u32[144,128]{1,0:T(1,128)}', space=vmem, size = 0x12000, scoped, tag = 'internal scratch']
  %s0 = inlined_call_operand.vmem [shape: bf16[28,128], index: 0, kind: input, shape index: {}]
  %s1 = inlined_call_operand.vmem [shape: bf16[32,28], index: 1, kind: input, shape index: {}]
  %s2 = inlined_call_operand.vmem [shape: f32[32,1], index: 2, kind: input, shape index: {}]
  %s3 = inlined_call_operand.vmem [shape: bf16[8,32], index: 3, kind: input, shape index: {}]
  %s4 = inlined_call_operand.vmem [shape: f32[8,1], index: 4, kind: input, shape index: {}]
  %s5 = inlined_call_operand.vmem [shape: f32[8,128], index: 5, kind: output, shape index: {}]
  %s6 = sld [smem:[#allocation0]]
  $region30: #{cnn_forward.1} parent=0
    _
  %s8 = ssub.s32 1, %s6
  %s9 = scalar_select 0, %s8, %s6
  // Predicated region
  $region2: #{cnn_forward.1} parent=0 // pred_check
    _
  $region3: #{cnn_forward.1} parent=0 // pred_check_branch
    %11 = sbr.rel (0) target = $region5
  $region4: #{cnn_forward.1} parent=0 // pred_region
    _
  $region5: #{cnn_forward.1} parent=0 // pred_fallthru
    _
  // Predicated region
  $region6: #{cnn_forward.1} parent=0 // pred_check
    _
  $region7: #{cnn_forward.1} parent=0 // pred_check_branch
    %13 = sbr.rel (0) target = $region9
  $region8: #{cnn_forward.1} parent=0 // pred_region
    _
  $region9: #{cnn_forward.1} parent=0 // pred_fallthru
    _
  // Predicated region
  $region10: #{cnn_forward.1} parent=0 // pred_check
    _
  $region11: #{cnn_forward.1} parent=0 // pred_check_branch
    %15 = sbr.rel (0) target = $region13
  $region12: #{cnn_forward.1} parent=0 // pred_region
    _
  $region13: #{cnn_forward.1} parent=0 // pred_fallthru
    _
  // Predicated region
  $region14: #{cnn_forward.1} parent=0 // pred_check
    _
  $region15: #{cnn_forward.1} parent=0 // pred_check_branch
    %17 = sbr.rel (0) target = $region17
  $region16: #{cnn_forward.1} parent=0 // pred_region
    _
  $region17: #{cnn_forward.1} parent=0 // pred_fallthru
    _
  // Predicated region
  $region18: #{cnn_forward.1} parent=0 // pred_check
    _
  $region19: #{cnn_forward.1} parent=0 // pred_check_branch
    %19 = sbr.rel (0) target = $region21
  $region20: #{cnn_forward.1} parent=0 // pred_region
    _
  $region21: #{cnn_forward.1} parent=0 // pred_fallthru
    _
  %v21 = vld [vmem:[%s1] sm:$0xf]
  %v22 = vld [vmem:[%s1 + $0x4] sm:$0xf]
  %v23 = vld [vmem:[%s1 + $0x8] sm:$0xf]
  %v24 = vld [vmem:[%s1 + $0xc] sm:$0xf]
  %v25 = vld [vmem:[%s0] sm:$0xf]
  %v26 = vld [vmem:[%s0 + $0x4] sm:$0xf]
  %v27 = vld [vmem:[%s0 + $0x8] sm:$0xf]
  %v28 = vld [vmem:[%s0 + $0xc] sm:$0x3]
  %v29 = vld [vmem:[%s2] sm:$0xff]
  %v30 = vld [vmem:[%s2 + $0x8] sm:$0xff]
  %v31 = vld [vmem:[%s2 + $0x10] sm:$0xff]
  %v32 = vld [vmem:[%s2 + $0x18] sm:$0xff]
  %34 = vset.pattern.permute.xlu0 0
  %35 = vperm.xlu0 %34, %v29
  %v36 = vpop.permute.xlu0 %35
  %39 = vset.pattern.permute.xlu0 0
  %40 = vperm.xlu0 %39, %v30
  %v41 = vpop.permute.xlu0 %40
  %44 = vset.pattern.permute.xlu0 0
  %45 = vperm.xlu0 %44, %v31
  %v46 = vpop.permute.xlu0 %45
  %49 = vset.pattern.permute.xlu0 0
  %50 = vperm.xlu0 %49, %v32
  %v51 = vpop.permute.xlu0 %50
  %v57 = vunpack.c.l.b16 %v21
  %v58 = vunpack.c.l.b16 %v22
  %v59 = vunpack.c.l.b16 %v23
  %v60 = vunpack.c.l.b16 %v24
  %v61 = vpack.c.b16 %v58, %v57
  %v62 = vpack.c.b16 %v60, %v59
  %v67 = vunpack.c.l.b16 %v25
  %v68 = vunpack.c.l.b16 %v26
  %v69 = vunpack.c.l.b16 %v27
  %v70 = vunpack.c.l.b16 %v28
  %v71 = vpack.c.b16 %v68, %v67
  %v72 = vpack.c.b16 %v70, %v69
  %vm74 = vcmask 228352
  %v76 = vsel %vm74, %v61, 0
  %v79 = vsel %vm74, %v62, 0
  %vm81 = vcmask 1045504
  %v83 = vsel %vm81, %v72, 0
  %85 = vmatprep.subr.bf16.mxu0 0
  %86 = vmatpush1.bf16.msra.mxu0 0
  %87 = vmatprep.subr.bf16.mxu0 0
  %88 = vmatpush1.bf16.msra.mxu0 0
  %89 = vmatprep.subr.bf16.mxu0 0
  %90 = vmatpush1.bf16.msra.mxu0 0
  %91 = vmatprep.subr.bf16.mxu0 0
  %92 = vmatpush1.bf16.msra.mxu0 0
  %93 = vmatprep.subr.bf16.mxu0 0
  %94 = vmatpush1.bf16.msra.mxu0 0
  %95 = vmatprep.subr.bf16.mxu0 0
  %96 = vmatpush1.bf16.msra.mxu0 0
  %97 = vmatprep.subr.bf16.mxu0 0
  %98 = vmatpush1.bf16.msra.mxu0 %v83
  %99 = vmatprep.subr.bf16.mxu0 0
  %100 = vmatpush1.bf16.msra.mxu0 %v71
  %101 = vmatprep.subr.bf16.mxu0 0
  %102 = vmatpush2.bf16.msra.mxu0 0
  %103 = vmatprep.subr.bf16.mxu0 0
  %104 = vmatpush2.bf16.msra.mxu0 0
  %105 = vmatprep.subr.bf16.mxu0 0
  %106 = vmatpush2.bf16.msra.mxu0 0
  %107 = vmatprep.subr.bf16.mxu0 0
  %108 = vmatpush2.bf16.msra.mxu0 0
  %109 = vmatprep.subr.bf16.mxu0 0
  %110 = vmatpush2.bf16.msra.mxu0 0
  %111 = vmatprep.subr.bf16.mxu0 0
  %112 = vmatpush2.bf16.msra.mxu0 0
  %113 = vmatprep.subr.bf16.mxu0 0
  %114 = vmatpush2.bf16.msra.mxu0 0
  %115 = vmatprep.subr.bf16.mxu0 0
  %116 = vmatpush2.bf16.msra.mxu0 0
  %117 = vmatprep.mubr.bf16.mxu0 0
  %118 = vmatmul.mubr.bf16.gmra.mxu0 %v76
  %v119 = vpop.f32.mrf.mxu0
  %v120 = vadd.f32 %v36, %v119
  %v121 = vpop.f32.mrf.mxu0
  %v122 = vpop.f32.mrf.mxu0
  %v123 = vadd.f32 %v41, %v122
  %v124 = vpop.f32.mrf.mxu0
  %125 = vmatprep.mubr.bf16.mxu0 0
  %126 = vmatmul.mubr.bf16.gmra.mxu0 %v79
  %v127 = vpop.f32.mrf.mxu0
  %v128 = vadd.f32 %v46, %v127
  %v129 = vpop.f32.mrf.mxu0
  %v130 = vpop.f32.mrf.mxu0
  %v131 = vadd.f32 %v51, %v130
  %v132 = vpop.f32.mrf.mxu0
  %133 = vdwg.mxu0
  %v134 = vmax.f32 %v120, 0.0
  %v135 = vmax.f32 %v123, 0.0
  %v136 = vmax.f32 %v128, 0.0
  %v137 = vmax.f32 %v131, 0.0
  %v138 = vpack.c.bf16 %v135, %v134
  %v139 = vpack.c.bf16 %v137, %v136
  %v140 = vld [vmem:[%s3] sm:$0xf]
  %v141 = vld [vmem:[%s4] sm:$0xff]
  %143 = vset.pattern.permute.xlu0 0
  %144 = vperm.xlu0 %143, %v141
  %v145 = vpop.permute.xlu0 %144
  %vm147 = vcmask 261120
  %v149 = vsel %vm147, %v140, 0
  %151 = vmatprep.subr.bf16.mxu0 0
  %152 = vmatpush1.bf16.msra.mxu0 0
  %153 = vmatprep.subr.bf16.mxu0 0
  %154 = vmatpush1.bf16.msra.mxu0 0
  %155 = vmatprep.subr.bf16.mxu0 0
  %156 = vmatpush1.bf16.msra.mxu0 0
  %157 = vmatprep.subr.bf16.mxu0 0
  %158 = vmatpush1.bf16.msra.mxu0 0
  %159 = vmatprep.subr.bf16.mxu0 0
  %160 = vmatpush1.bf16.msra.mxu0 0
  %161 = vmatprep.subr.bf16.mxu0 0
  %162 = vmatpush1.bf16.msra.mxu0 0
  %163 = vmatprep.subr.bf16.mxu0 0
  %164 = vmatpush1.bf16.msra.mxu0 %v139
  %165 = vmatprep.subr.bf16.mxu0 0
  %166 = vmatpush1.bf16.msra.mxu0 %v138
  %167 = vmatprep.subr.bf16.mxu0 0
  %168 = vmatpush2.bf16.msra.mxu0 0
  %169 = vmatprep.subr.bf16.mxu0 0
  %170 = vmatpush2.bf16.msra.mxu0 0
  %171 = vmatprep.subr.bf16.mxu0 0
  %172 = vmatpush2.bf16.msra.mxu0 0
  %173 = vmatprep.subr.bf16.mxu0 0
  %174 = vmatpush2.bf16.msra.mxu0 0
  %175 = vmatprep.subr.bf16.mxu0 0
  %176 = vmatpush2.bf16.msra.mxu0 0
  %177 = vmatprep.subr.bf16.mxu0 0
  %178 = vmatpush2.bf16.msra.mxu0 0
  %179 = vmatprep.subr.bf16.mxu0 0
  %180 = vmatpush2.bf16.msra.mxu0 0
  %181 = vmatprep.subr.bf16.mxu0 0
  %182 = vmatpush2.bf16.msra.mxu0 0
  %183 = vmatprep.mubr.bf16.mxu0 0
  %184 = vmatmul.mubr.bf16.gmra.mxu0 %v149
  %v185 = vpop.f32.mrf.mxu0
  %v186 = vadd.f32 %v145, %v185
  %v187 = vpop.f32.mrf.mxu0
  %v188 = vpop.f32.mrf.mxu0
  %v189 = vpop.f32.mrf.mxu0
  %190 = vdwg.mxu0
  %191 = vst [vmem:[%s5] sm:$0xff] %v186
  // Predicated region
  $region22: #{cnn_forward.1} parent=0 // pred_check
    _
  $region23: #{cnn_forward.1} parent=0 // pred_check_branch
    %193 = sbr.rel (0) target = $region25
  $region24: #{cnn_forward.1} parent=0 // pred_region
    _
  $region25: #{cnn_forward.1} parent=0 // pred_fallthru
    _
  // Predicated region
  $region26: #{cnn_forward.1} parent=0 // pred_check
    _
  $region27: #{cnn_forward.1} parent=0 // pred_check_branch
    %195 = sbr.rel (0) target = $region29
  $region28: #{cnn_forward.1} parent=0 // pred_region
    _
  $region29: #{cnn_forward.1} parent=0 // pred_fallthru
    _

</llo_original>
